<compile_context>
chip_gen: v6e
topology: v6e:2x2x1
jax: 0.10.0
libtpu: 0.0.40
codegen_flags: <defaults>
</compile_context>

<pallas_src>
import functools

import jax
import jax.numpy as jnp
from jax.experimental import pallas as pl
from jax.experimental.pallas import tpu as pltpu

EPS = 1e-8            # detail.safe_division / normalization epsilon (reconstructed)
HUBER_DELTA = 1.0     # torch.nn.HuberLoss default
RKDD_WEIGHT = 1.0
RKDA_WEIGHT = 2.0

# Contract the shared last dim of both operands: x @ x^T without a transpose.
_DN_LAST = (((1,), (1,)), ((), ()))


def _huber(pred, target, delta=HUBER_DELTA):
    d = pred - target
    ad = jnp.abs(d)
    return jnp.where(ad < delta, 0.5 * d * d, delta * (ad - 0.5 * delta))


def _rkd_kernel(src_ref, emb_ref, out_ref, acc_ang_ref, rkdd_ref, *, n, m):
    """One grid step per angle anchor `a` (reduction axis -> "arbitrary").

    src_ref : (M, N, Dp) resident VMEM block (teacher channels, lane-padded)
    emb_ref : (N, Dp)    resident VMEM block (student embeddings, lane-padded)
    out_ref : (1, 1)     final scalar loss
    acc_ang_ref / rkdd_ref : (1, 1) f32 VMEM accumulators (persist across steps)
    """
    a = pl.program_id(0)
    last = pl.num_programs(0) - 1

    emb = emb_ref[...].astype(jnp.float32)                          # (N, Dp)

    # --------------- RKD-D (distance) term: computed once, at anchor 0 ---------------
    @pl.when(a == 0)
    def _init_and_distance():
        acc_ang_ref[...] = jnp.zeros_like(acc_ang_ref)

        row = jax.lax.broadcasted_iota(jnp.int32, (n, n), 0)
        col = jax.lax.broadcasted_iota(jnp.int32, (n, n), 1)
        offdiag = row != col

        def sphere_distances(x):
            # L2-normalize rows, Gram on the MXU with bf16 operands / f32 acc,
            # sphere distance sqrt(2 - 2*cos); self-distance set to its exact 0.
            xn = x * jax.lax.rsqrt(jnp.sum(x * x, axis=-1, keepdims=True) + EPS)
            xb = xn.astype(jnp.bfloat16)
            dot = jax.lax.dot_general(xb, xb, _DN_LAST,
                                      preferred_element_type=jnp.float32)
            d = jnp.sqrt(jnp.maximum(2.0 - 2.0 * dot, 0.0))
            return jnp.where(offdiag, d, 0.0)

        src_avg = sphere_distances(src_ref.at[0][...].astype(jnp.float32))
        for mi in range(1, m):
            src_avg = src_avg + sphere_distances(src_ref.at[mi][...].astype(jnp.float32))
        src_avg = src_avg * (1.0 / m)                               # average over channels
        dist = sphere_distances(emb)

        inv_nm1 = 1.0 / (n - 1)
        src_mean = jnp.sum(src_avg, axis=1, keepdims=True) * inv_nm1
        mean_d = jnp.sum(dist, axis=1, keepdims=True) * inv_nm1
        h = _huber(dist / (mean_d + EPS), src_avg / (src_mean + EPS))
        rkdd_ref[...] = jnp.full((1, 1), jnp.sum(h) * (1.0 / (n * n)), jnp.float32)

    # --------------- RKD-A (angle) term: this anchor's N x N contribution ---------------
    def angle_gram(x, x_anchor):
        # ang[b, c] = <(x_b - x_a)/|.|, (x_c - x_a)/|.|>; anchor row -> zero vector.
        td = x - x_anchor
        tdn = td * jax.lax.rsqrt(jnp.sum(td * td, axis=-1, keepdims=True) + EPS)
        tdb = tdn.astype(jnp.bfloat16)
        return jax.lax.dot_general(tdb, tdb, _DN_LAST,
                                   preferred_element_type=jnp.float32)

    ang = angle_gram(emb, emb_ref[pl.ds(a, 1), :].astype(jnp.float32))

    ch0 = src_ref.at[0]
    src_ang = angle_gram(ch0[...].astype(jnp.float32),
                         ch0[pl.ds(a, 1), :].astype(jnp.float32))
    for mi in range(1, m):
        ch = src_ref.at[mi]
        src_ang = src_ang + angle_gram(ch[...].astype(jnp.float32),
                                       ch[pl.ds(a, 1), :].astype(jnp.float32))
    src_ang = src_ang * (1.0 / m)

    h_ang = _huber(ang, src_ang)
    acc_ang_ref[...] = acc_ang_ref[...] + jnp.full((1, 1), jnp.sum(h_ang), jnp.float32)

    # --------------- finalize ---------------
    @pl.when(a == last)
    def _finalize():
        rkda = acc_ang_ref[...] * (1.0 / (n * n * n))
        out_ref[...] = (RKDD_WEIGHT * rkdd_ref[...] + RKDA_WEIGHT * rkda).astype(jnp.float32)


def _pad_lanes(x, multiple=128):
    pad = (-x.shape[-1]) % multiple
    if pad:
        x = jnp.pad(x, [(0, 0)] * (x.ndim - 1) + [(0, pad)])
    return x


def rkd_loss(source_embeddings, embeddings):
    """source_embeddings: [N, M, Ds] (teacher, multi-channel), embeddings: [N, D]
    (student) -> scalar f32 loss = 1.0 * rkdd + 2.0 * rkda."""
    n, m, _ = source_embeddings.shape
    # Teacher embeddings are .detach()'ed in the PyTorch module; this is a no-op
    # for a forward-only kernel. Channel axis is moved first so the kernel slices
    # the leading dim of the ref; feature axes are zero-padded to 128 lanes (exact).
    src = _pad_lanes(jnp.transpose(source_embeddings, (1, 0, 2)).astype(jnp.float32))
    emb = _pad_lanes(embeddings.astype(jnp.float32))
    dsp = src.shape[-1]
    dp = emb.shape[-1]

    kernel = functools.partial(_rkd_kernel, n=n, m=m)
    out = pl.pallas_call(
        kernel,
        out_shape=jax.ShapeDtypeStruct((1, 1), jnp.float32),
        grid_spec=pltpu.PrefetchScalarGridSpec(
            num_scalar_prefetch=0,
            grid=(n,),                                 # one step per angle anchor
            in_specs=[
                # Full arrays stay resident in VMEM across the anchor loop
                # (constant block index): VMEM footprint is O(N*(M*Ds + D) + N^2),
                # never O(N^3); each anchor's N x N angle panel is reduced online.
                pl.BlockSpec((m, n, dsp), lambda a: (0, 0, 0)),
                pl.BlockSpec((n, dp), lambda a: (0, 0)),
            ],
            out_specs=pl.BlockSpec((1, 1), lambda a: (0, 0)),
            scratch_shapes=[
                pltpu.VMEM((1, 1), jnp.float32),       # running angle-Huber sum
                pltpu.VMEM((1, 1), jnp.float32),       # rkdd term (from anchor 0)
            ],
        ),
        # The anchor axis carries the scalar reduction -> "arbitrary".
        # TODO(synk): for v7x megacore, emit per-anchor partial sums to a lane-dense
        #             output and mark this axis "parallel", reducing in the wrapper.
        compiler_params=pltpu.CompilerParams(dimension_semantics=("arbitrary",)),
    )(src, emb)
    return out[0, 0]


def _reference_loss(source_embeddings, embeddings):
    """Pure-JAX reference with identical math (same reconstruction of `detail.*`
    and the same bf16-operand MXU policy) for a correctness check."""
    s = source_embeddings.astype(jnp.float32)          # (N, M, Ds)
    e = embeddings.astype(jnp.float32)                 # (N, D)
    n, m, _ = s.shape
    offdiag = ~jnp.eye(n, dtype=bool)

    def sphere_distances(x):
        xn = x * jax.lax.rsqrt(jnp.sum(x * x, -1, keepdims=True) + EPS)
        xb = xn.astype(jnp.bfloat16)
        dot = jax.lax.dot_general(xb, xb, _DN_LAST, preferred_element_type=jnp.float32)
        return jnp.where(offdiag, jnp.sqrt(jnp.maximum(2.0 - 2.0 * dot, 0.0)), 0.0)

    src_avg = sum(sphere_distances(s[:, i, :]) for i in range(m)) / m
    dist = sphere_distances(e)
    src_mean = jnp.sum(src_avg, 1, keepdims=True) / (n - 1)
    mean_d = jnp.sum(dist, 1, keepdims=True) / (n - 1)
    rkdd = jnp.mean(_huber(dist / (mean_d + EPS), src_avg / (src_mean + EPS)))

    def triplet_angles(x):
        td = x[None, :, :] - x[:, None, :]             # td[a, b] = x[b] - x[a]
        tdn = td * jax.lax.rsqrt(jnp.sum(td * td, -1, keepdims=True) + EPS)
        tdb = tdn.astype(jnp.bfloat16)
        return jax.lax.dot_general(tdb, tdb, (((2,), (2,)), ((0,), (0,))),
                                   preferred_element_type=jnp.float32)

    src_ang = sum(triplet_angles(s[:, i, :]) for i in range(m)) / m
    ang = triplet_angles(e)
    rkda = jnp.mean(_huber(ang, src_ang))
    return RKDD_WEIGHT * rkdd + RKDA_WEIGHT * rkda


if __name__ == "__main__":
    key = jax.random.PRNGKey(0)
    k_src, k_emb = jax.random.split(key)

    N, M, D_SRC, D_EMB = 8, 2, 32, 32
    source_embeddings = jax.random.normal(k_src, (N, M, D_SRC), dtype=jnp.float32)
    embeddings = jax.random.normal(k_emb, (N, D_EMB), dtype=jnp.float32)

    loss = jax.block_until_ready(rkd_loss(source_embeddings, embeddings))
    ref = jax.block_until_ready(_reference_loss(source_embeddings, embeddings))
    assert jnp.allclose(loss, ref, rtol=1e-3, atol=1e-3), (loss, ref)

    print("KERNEL_OK")
</pallas_src>

<mosaic_0001>
module attributes {stable_mosaic.version = 11 : i64} {
  func.func @_rkd_kernel(%arg0: i32, %arg1: memref<2x8x128xf32, #tpu.memory_space<vmem>>, %arg2: memref<8x128xf32, #tpu.memory_space<vmem>>, %arg3: memref<1x1xf32, #tpu.memory_space<vmem>>, %arg4: memref<1x1xf32, #tpu.memory_space<vmem>>, %arg5: memref<1x1xf32, #tpu.memory_space<vmem>>) attributes {dimension_semantics = [#tpu.dimension_semantics<arbitrary>], iteration_bounds = array<i64: 8>, scalar_prefetch = 0 : i64, scratch_operands = 2 : i64, tpu.core_type = #tpu.core_type<tc>, window_params = [{pipeline_mode = #tpu.pipeline_mode<synchronous>, transform_indices = @transform_0, window_bounds = array<i64: 2, 8, 128>}, {pipeline_mode = #tpu.pipeline_mode<synchronous>, transform_indices = @transform_1, window_bounds = array<i64: 8, 128>}, {pipeline_mode = #tpu.pipeline_mode<synchronous>, transform_indices = @transform_2, window_bounds = array<i64: 1, 1>}]} {
    %c0 = arith.constant 0 : index
    %c0_0 = arith.constant 0 : index
    %0 = vector.load %arg2[%c0, %c0_0] : memref<8x128xf32, #tpu.memory_space<vmem>>, vector<8x128xf32>
    %c0_i32 = arith.constant 0 : i32
    %1 = arith.cmpi eq, %arg0, %c0_i32 : i32
    %2 = arith.extui %1 : i1 to i32
    %c0_i32_1 = arith.constant 0 : i32
    %3 = arith.cmpi ne, %2, %c0_i32_1 : i32
    scf.if %3 {
      %cst_34 = arith.constant 0.000000e+00 : f32
      %80 = vector.broadcast %cst_34 : f32 to vector<1x1xf32>
      %c0_35 = arith.constant 0 : index
      %c0_36 = arith.constant 0 : index
      %81 = vector.load %arg4[%c0_35, %c0_36] : memref<1x1xf32, #tpu.memory_space<vmem>>, vector<1x1xf32>
      tpu.vector_store %arg4[%c0_35, %c0_36], %80 {strides = array<i32>} : memref<1x1xf32, #tpu.memory_space<vmem>>, vector<1x1xf32>,
      %82 = tpu.iota {dimensions = array<i32: 0>} : vector<8x8xi32>
      %83 = tpu.iota {dimensions = array<i32: 1>} : vector<8x8xi32>
      %84 = arith.cmpi ne, %82, %83 : vector<8x8xi32>
      %c0_37 = arith.constant 0 : index
      %c0_38 = arith.constant 0 : index
      %c0_39 = arith.constant 0 : index
      %85 = vector.load %arg1[%c0_37, %c0_38, %c0_39] : memref<2x8x128xf32, #tpu.memory_space<vmem>>, vector<1x8x128xf32>
      %86 = vector.shape_cast %85 : vector<1x8x128xf32> to vector<8x128xf32>
      %87 = arith.mulf %86, %86 : vector<8x128xf32>
      %cst_40 = arith.constant dense<0.000000e+00> : vector<8xf32>
      %88 = vector.multi_reduction <add>, %87, %cst_40 [1] : vector<8x128xf32> to vector<8xf32>
      %89 = vector.shape_cast %88 : vector<8xf32> to vector<8x1xf32>
      %cst_41 = arith.constant 9.99999993E-9 : f32
      %90 = vector.broadcast %cst_41 : f32 to vector<8x1xf32>
      %91 = arith.addf %89, %90 : vector<8x1xf32>
      %92 = math.rsqrt %91 : vector<8x1xf32>
      %93 = vector.broadcast %92 : vector<8x1xf32> to vector<8x128xf32>
      %94 = arith.mulf %86, %93 : vector<8x128xf32>
      %95 = arith.truncf %94 : vector<8x128xf32> to vector<8x128xbf16>
      %cst_42 = arith.constant dense<0.000000e+00> : vector<8x8xf32>
      %96 = tpu.matmul %95, %95, %cst_42 {dimension_numbers = #tpu.dot_dimension_numbers<[1], [1], [0], [0], [0, 0, 1, 0], [], []>} : vector<8x128xbf16>, vector<8x128xbf16>, vector<8x8xf32> -> vector<8x8xf32>
      %cst_43 = arith.constant 2.000000e+00 : f32
      %97 = vector.broadcast %cst_43 : f32 to vector<8x8xf32>
      %98 = arith.mulf %97, %96 : vector<8x8xf32>
      %cst_44 = arith.constant 2.000000e+00 : f32
      %99 = vector.broadcast %cst_44 : f32 to vector<8x8xf32>
      %100 = arith.subf %99, %98 : vector<8x8xf32>
      %cst_45 = arith.constant 0.000000e+00 : f32
      %101 = vector.broadcast %cst_45 : f32 to vector<8x8xf32>
      %102 = arith.maximumf %100, %101 : vector<8x8xf32>
      %103 = math.sqrt %102 : vector<8x8xf32>
      %cst_46 = arith.constant 0.000000e+00 : f32
      %104 = vector.broadcast %cst_46 : f32 to vector<8x8xf32>
      %105 = arith.select %84, %103, %104 : vector<8x8xi1>, vector<8x8xf32>
      %c1_47 = arith.constant 1 : index
      %c0_48 = arith.constant 0 : index
      %c0_49 = arith.constant 0 : index
      %106 = vector.load %arg1[%c1_47, %c0_48, %c0_49] : memref<2x8x128xf32, #tpu.memory_space<vmem>>, vector<1x8x128xf32>
      %107 = vector.shape_cast %106 : vector<1x8x128xf32> to vector<8x128xf32>
      %108 = arith.mulf %107, %107 : vector<8x128xf32>
      %cst_50 = arith.constant dense<0.000000e+00> : vector<8xf32>
      %109 = vector.multi_reduction <add>, %108, %cst_50 [1] : vector<8x128xf32> to vector<8xf32>
      %110 = vector.shape_cast %109 : vector<8xf32> to vector<8x1xf32>
      %cst_51 = arith.constant 9.99999993E-9 : f32
      %111 = vector.broadcast %cst_51 : f32 to vector<8x1xf32>
      %112 = arith.addf %110, %111 : vector<8x1xf32>
      %113 = math.rsqrt %112 : vector<8x1xf32>
      %114 = vector.broadcast %113 : vector<8x1xf32> to vector<8x128xf32>
      %115 = arith.mulf %107, %114 : vector<8x128xf32>
      %116 = arith.truncf %115 : vector<8x128xf32> to vector<8x128xbf16>
      %cst_52 = arith.constant dense<0.000000e+00> : vector<8x8xf32>
      %117 = tpu.matmul %116, %116, %cst_52 {dimension_numbers = #tpu.dot_dimension_numbers<[1], [1], [0], [0], [0, 0, 1, 0], [], []>} : vector<8x128xbf16>, vector<8x128xbf16>, vector<8x8xf32> -> vector<8x8xf32>
      %cst_53 = arith.constant 2.000000e+00 : f32
      %118 = vector.broadcast %cst_53 : f32 to vector<8x8xf32>
      %119 = arith.mulf %118, %117 : vector<8x8xf32>
      %cst_54 = arith.constant 2.000000e+00 : f32
      %120 = vector.broadcast %cst_54 : f32 to vector<8x8xf32>
      %121 = arith.subf %120, %119 : vector<8x8xf32>
      %cst_55 = arith.constant 0.000000e+00 : f32
      %122 = vector.broadcast %cst_55 : f32 to vector<8x8xf32>
      %123 = arith.maximumf %121, %122 : vector<8x8xf32>
      %124 = math.sqrt %123 : vector<8x8xf32>
      %cst_56 = arith.constant 0.000000e+00 : f32
      %125 = vector.broadcast %cst_56 : f32 to vector<8x8xf32>
      %126 = arith.select %84, %124, %125 : vector<8x8xi1>, vector<8x8xf32>
      %127 = arith.addf %105, %126 : vector<8x8xf32>
      %cst_57 = arith.constant 5.000000e-01 : f32
      %128 = vector.broadcast %cst_57 : f32 to vector<8x8xf32>
      %129 = arith.mulf %127, %128 : vector<8x8xf32>
      %130 = arith.mulf %0, %0 : vector<8x128xf32>
      %cst_58 = arith.constant dense<0.000000e+00> : vector<8xf32>
      %131 = vector.multi_reduction <add>, %130, %cst_58 [1] : vector<8x128xf32> to vector<8xf32>
      %132 = vector.shape_cast %131 : vector<8xf32> to vector<8x1xf32>
      %cst_59 = arith.constant 9.99999993E-9 : f32
      %133 = vector.broadcast %cst_59 : f32 to vector<8x1xf32>
      %134 = arith.addf %132, %133 : vector<8x1xf32>
      %135 = math.rsqrt %134 : vector<8x1xf32>
      %136 = vector.broadcast %135 : vector<8x1xf32> to vector<8x128xf32>
      %137 = arith.mulf %0, %136 : vector<8x128xf32>
      %138 = arith.truncf %137 : vector<8x128xf32> to vector<8x128xbf16>
      %cst_60 = arith.constant dense<0.000000e+00> : vector<8x8xf32>
      %139 = tpu.matmul %138, %138, %cst_60 {dimension_numbers = #tpu.dot_dimension_numbers<[1], [1], [0], [0], [0, 0, 1, 0], [], []>} : vector<8x128xbf16>, vector<8x128xbf16>, vector<8x8xf32> -> vector<8x8xf32>
      %cst_61 = arith.constant 2.000000e+00 : f32
      %140 = vector.broadcast %cst_61 : f32 to vector<8x8xf32>
      %141 = arith.mulf %140, %139 : vector<8x8xf32>
      %cst_62 = arith.constant 2.000000e+00 : f32
      %142 = vector.broadcast %cst_62 : f32 to vector<8x8xf32>
      %143 = arith.subf %142, %141 : vector<8x8xf32>
      %cst_63 = arith.constant 0.000000e+00 : f32
      %144 = vector.broadcast %cst_63 : f32 to vector<8x8xf32>
      %145 = arith.maximumf %143, %144 : vector<8x8xf32>
      %146 = math.sqrt %145 : vector<8x8xf32>
      %cst_64 = arith.constant 0.000000e+00 : f32
      %147 = vector.broadcast %cst_64 : f32 to vector<8x8xf32>
      %148 = arith.select %84, %146, %147 : vector<8x8xi1>, vector<8x8xf32>
      %cst_65 = arith.constant dense<0.000000e+00> : vector<8xf32>
      %149 = vector.multi_reduction <add>, %129, %cst_65 [1] : vector<8x8xf32> to vector<8xf32>
      %150 = vector.shape_cast %149 : vector<8xf32> to vector<8x1xf32>
      %cst_66 = arith.constant 0.142857149 : f32
      %151 = vector.broadcast %cst_66 : f32 to vector<8x1xf32>
      %152 = arith.mulf %150, %151 : vector<8x1xf32>
      %cst_67 = arith.constant dense<0.000000e+00> : vector<8xf32>
      %153 = vector.multi_reduction <add>, %148, %cst_67 [1] : vector<8x8xf32> to vector<8xf32>
      %154 = vector.shape_cast %153 : vector<8xf32> to vector<8x1xf32>
      %cst_68 = arith.constant 0.142857149 : f32
      %155 = vector.broadcast %cst_68 : f32 to vector<8x1xf32>
      %156 = arith.mulf %154, %155 : vector<8x1xf32>
      %cst_69 = arith.constant 9.99999993E-9 : f32
      %157 = vector.broadcast %cst_69 : f32 to vector<8x1xf32>
      %158 = arith.addf %156, %157 : vector<8x1xf32>
      %159 = vector.broadcast %158 : vector<8x1xf32> to vector<8x8xf32>
      %160 = arith.divf %148, %159 : vector<8x8xf32>
      %cst_70 = arith.constant 9.99999993E-9 : f32
      %161 = vector.broadcast %cst_70 : f32 to vector<8x1xf32>
      %162 = arith.addf %152, %161 : vector<8x1xf32>
      %163 = vector.broadcast %162 : vector<8x1xf32> to vector<8x8xf32>
      %164 = arith.divf %129, %163 : vector<8x8xf32>
      %165 = arith.subf %160, %164 : vector<8x8xf32>
      %166 = math.absf %165 : vector<8x8xf32>
      %cst_71 = arith.constant 1.000000e+00 : f32
      %167 = vector.broadcast %cst_71 : f32 to vector<8x8xf32>
      %168 = arith.cmpf olt, %166, %167 : vector<8x8xf32>
      %cst_72 = arith.constant 5.000000e-01 : f32
      %169 = vector.broadcast %cst_72 : f32 to vector<8x8xf32>
      %170 = arith.mulf %169, %165 : vector<8x8xf32>
      %171 = arith.mulf %170, %165 : vector<8x8xf32>
      %cst_73 = arith.constant 5.000000e-01 : f32
      %172 = vector.broadcast %cst_73 : f32 to vector<8x8xf32>
      %173 = arith.subf %166, %172 : vector<8x8xf32>
      %cst_74 = arith.constant 1.000000e+00 : f32
      %174 = vector.broadcast %cst_74 : f32 to vector<8x8xf32>
      %175 = arith.mulf %174, %173 : vector<8x8xf32>
      %176 = arith.select %168, %171, %175 : vector<8x8xi1>, vector<8x8xf32>
      %177 = vector.shape_cast %176 : vector<8x8xf32> to vector<1x8x8xf32>
      %cst_75 = arith.constant dense<0.000000e+00> : vector<1xf32>
      %178 = vector.multi_reduction <add>, %177, %cst_75 [1, 2] : vector<1x8x8xf32> to vector<1xf32>
      %179 = vector.shape_cast %178 : vector<1xf32> to vector<1x1x1xf32>
      %180 = vector.extract %179[0, 0, 0] : f32 from vector<1x1x1xf32>
      %cst_76 = arith.constant 1.562500e-02 : f32
      %181 = arith.mulf %180, %cst_76 : f32
      %182 = vector.broadcast %181 : f32 to vector<1x1xf32>
      %c0_77 = arith.constant 0 : index
      %c0_78 = arith.constant 0 : index
      %183 = vector.load %arg5[%c0_77, %c0_78] : memref<1x1xf32, #tpu.memory_space<vmem>>, vector<1x1xf32>
      tpu.vector_store %arg5[%c0_77, %c0_78], %182 {strides = array<i32>} : memref<1x1xf32, #tpu.memory_space<vmem>>, vector<1x1xf32>,
    } else {
    }
    %4 = arith.index_cast %arg0 : i32 to index
    %c0_2 = arith.constant 0 : index
    %5 = vector.load %arg2[%4, %c0_2] : memref<8x128xf32, #tpu.memory_space<vmem>>, vector<1x128xf32>
    %6 = vector.broadcast %5 : vector<1x128xf32> to vector<8x128xf32>
    %7 = arith.subf %0, %6 : vector<8x128xf32>
    %8 = arith.mulf %7, %7 : vector<8x128xf32>
    %cst = arith.constant dense<0.000000e+00> : vector<8xf32>
    %9 = vector.multi_reduction <add>, %8, %cst [1] : vector<8x128xf32> to vector<8xf32>
    %10 = vector.shape_cast %9 : vector<8xf32> to vector<8x1xf32>
    %cst_3 = arith.constant 9.99999993E-9 : f32
    %11 = vector.broadcast %cst_3 : f32 to vector<8x1xf32>
    %12 = arith.addf %10, %11 : vector<8x1xf32>
    %13 = math.rsqrt %12 : vector<8x1xf32>
    %14 = vector.broadcast %13 : vector<8x1xf32> to vector<8x128xf32>
    %15 = arith.mulf %7, %14 : vector<8x128xf32>
    %16 = arith.truncf %15 : vector<8x128xf32> to vector<8x128xbf16>
    %cst_4 = arith.constant dense<0.000000e+00> : vector<8x8xf32>
    %17 = tpu.matmul %16, %16, %cst_4 {dimension_numbers = #tpu.dot_dimension_numbers<[1], [1], [0], [0], [0, 0, 1, 0], [], []>} : vector<8x128xbf16>, vector<8x128xbf16>, vector<8x8xf32> -> vector<8x8xf32>
    %c0_5 = arith.constant 0 : index
    %c0_6 = arith.constant 0 : index
    %c0_7 = arith.constant 0 : index
    %18 = vector.load %arg1[%c0_5, %c0_6, %c0_7] : memref<2x8x128xf32, #tpu.memory_space<vmem>>, vector<1x8x128xf32>
    %19 = vector.shape_cast %18 : vector<1x8x128xf32> to vector<8x128xf32>
    %c0_i32_8 = arith.constant 0 : i32
    %c0_i32_9 = arith.constant 0 : i32
    %c0_i32_10 = arith.constant 0 : i32
    %20 = tpu.memref_slice %arg1[%c0_i32_8, %c0_i32_9, %c0_i32_10] : memref<2x8x128xf32, #tpu.memory_space<vmem>> -> memref<1x8x128xf32, #tpu.memory_space<vmem>>
    %21 = tpu.memref_squeeze %20 : memref<1x8x128xf32, #tpu.memory_space<vmem>> -> memref<8x128xf32, #tpu.memory_space<vmem>>
    %22 = arith.index_cast %arg0 : i32 to index
    %c0_11 = arith.constant 0 : index
    %23 = vector.load %21[%22, %c0_11] : memref<8x128xf32, #tpu.memory_space<vmem>>, vector<1x128xf32>
    %24 = vector.broadcast %23 : vector<1x128xf32> to vector<8x128xf32>
    %25 = arith.subf %19, %24 : vector<8x128xf32>
    %26 = arith.mulf %25, %25 : vector<8x128xf32>
    %cst_12 = arith.constant dense<0.000000e+00> : vector<8xf32>
    %27 = vector.multi_reduction <add>, %26, %cst_12 [1] : vector<8x128xf32> to vector<8xf32>
    %28 = vector.shape_cast %27 : vector<8xf32> to vector<8x1xf32>
    %cst_13 = arith.constant 9.99999993E-9 : f32
    %29 = vector.broadcast %cst_13 : f32 to vector<8x1xf32>
    %30 = arith.addf %28, %29 : vector<8x1xf32>
    %31 = math.rsqrt %30 : vector<8x1xf32>
    %32 = vector.broadcast %31 : vector<8x1xf32> to vector<8x128xf32>
    %33 = arith.mulf %25, %32 : vector<8x128xf32>
    %34 = arith.truncf %33 : vector<8x128xf32> to vector<8x128xbf16>
    %cst_14 = arith.constant dense<0.000000e+00> : vector<8x8xf32>
    %35 = tpu.matmul %34, %34, %cst_14 {dimension_numbers = #tpu.dot_dimension_numbers<[1], [1], [0], [0], [0, 0, 1, 0], [], []>} : vector<8x128xbf16>, vector<8x128xbf16>, vector<8x8xf32> -> vector<8x8xf32>
    %c1 = arith.constant 1 : index
    %c0_15 = arith.constant 0 : index
    %c0_16 = arith.constant 0 : index
    %36 = vector.load %arg1[%c1, %c0_15, %c0_16] : memref<2x8x128xf32, #tpu.memory_space<vmem>>, vector<1x8x128xf32>
    %37 = vector.shape_cast %36 : vector<1x8x128xf32> to vector<8x128xf32>
    %c1_i32 = arith.constant 1 : i32
    %c0_i32_17 = arith.constant 0 : i32
    %c0_i32_18 = arith.constant 0 : i32
    %38 = tpu.memref_slice %arg1[%c1_i32, %c0_i32_17, %c0_i32_18] : memref<2x8x128xf32, #tpu.memory_space<vmem>> -> memref<1x8x128xf32, #tpu.memory_space<vmem>>
    %39 = tpu.memref_squeeze %38 : memref<1x8x128xf32, #tpu.memory_space<vmem>> -> memref<8x128xf32, #tpu.memory_space<vmem>>
    %40 = arith.index_cast %arg0 : i32 to index
    %c0_19 = arith.constant 0 : index
    %41 = vector.load %39[%40, %c0_19] : memref<8x128xf32, #tpu.memory_space<vmem>>, vector<1x128xf32>
    %42 = vector.broadcast %41 : vector<1x128xf32> to vector<8x128xf32>
    %43 = arith.subf %37, %42 : vector<8x128xf32>
    %44 = arith.mulf %43, %43 : vector<8x128xf32>
    %cst_20 = arith.constant dense<0.000000e+00> : vector<8xf32>
    %45 = vector.multi_reduction <add>, %44, %cst_20 [1] : vector<8x128xf32> to vector<8xf32>
    %46 = vector.shape_cast %45 : vector<8xf32> to vector<8x1xf32>
    %cst_21 = arith.constant 9.99999993E-9 : f32
    %47 = vector.broadcast %cst_21 : f32 to vector<8x1xf32>
    %48 = arith.addf %46, %47 : vector<8x1xf32>
    %49 = math.rsqrt %48 : vector<8x1xf32>
    %50 = vector.broadcast %49 : vector<8x1xf32> to vector<8x128xf32>
    %51 = arith.mulf %43, %50 : vector<8x128xf32>
    %52 = arith.truncf %51 : vector<8x128xf32> to vector<8x128xbf16>
    %cst_22 = arith.constant dense<0.000000e+00> : vector<8x8xf32>
    %53 = tpu.matmul %52, %52, %cst_22 {dimension_numbers = #tpu.dot_dimension_numbers<[1], [1], [0], [0], [0, 0, 1, 0], [], []>} : vector<8x128xbf16>, vector<8x128xbf16>, vector<8x8xf32> -> vector<8x8xf32>
    %54 = arith.addf %35, %53 : vector<8x8xf32>
    %cst_23 = arith.constant 5.000000e-01 : f32
    %55 = vector.broadcast %cst_23 : f32 to vector<8x8xf32>
    %56 = arith.mulf %54, %55 : vector<8x8xf32>
    %57 = arith.subf %17, %56 : vector<8x8xf32>
    %58 = math.absf %57 : vector<8x8xf32>
    %cst_24 = arith.constant 1.000000e+00 : f32
    %59 = vector.broadcast %cst_24 : f32 to vector<8x8xf32>
    %60 = arith.cmpf olt, %58, %59 : vector<8x8xf32>
    %cst_25 = arith.constant 5.000000e-01 : f32
    %61 = vector.broadcast %cst_25 : f32 to vector<8x8xf32>
    %62 = arith.mulf %61, %57 : vector<8x8xf32>
    %63 = arith.mulf %62, %57 : vector<8x8xf32>
    %cst_26 = arith.constant 5.000000e-01 : f32
    %64 = vector.broadcast %cst_26 : f32 to vector<8x8xf32>
    %65 = arith.subf %58, %64 : vector<8x8xf32>
    %cst_27 = arith.constant 1.000000e+00 : f32
    %66 = vector.broadcast %cst_27 : f32 to vector<8x8xf32>
    %67 = arith.mulf %66, %65 : vector<8x8xf32>
    %68 = arith.select %60, %63, %67 : vector<8x8xi1>, vector<8x8xf32>
    %c0_28 = arith.constant 0 : index
    %c0_29 = arith.constant 0 : index
    %69 = vector.load %arg4[%c0_28, %c0_29] : memref<1x1xf32, #tpu.memory_space<vmem>>, vector<1x1xf32>
    %70 = vector.shape_cast %68 : vector<8x8xf32> to vector<1x8x8xf32>
    %cst_30 = arith.constant dense<0.000000e+00> : vector<1xf32>
    %71 = vector.multi_reduction <add>, %70, %cst_30 [1, 2] : vector<1x8x8xf32> to vector<1xf32>
    %72 = vector.shape_cast %71 : vector<1xf32> to vector<1x1x1xf32>
    %73 = vector.extract %72[0, 0, 0] : f32 from vector<1x1x1xf32>
    %74 = vector.broadcast %73 : f32 to vector<1x1xf32>
    %75 = arith.addf %69, %74 : vector<1x1xf32>
    %c0_31 = arith.constant 0 : index
    %c0_32 = arith.constant 0 : index
    %76 = vector.load %arg4[%c0_31, %c0_32] : memref<1x1xf32, #tpu.memory_space<vmem>>, vector<1x1xf32>
    tpu.vector_store %arg4[%c0_31, %c0_32], %75 {strides = array<i32>} : memref<1x1xf32, #tpu.memory_space<vmem>>, vector<1x1xf32>,
    %c7_i32 = arith.constant 7 : i32
    %77 = arith.cmpi eq, %arg0, %c7_i32 : i32
    %78 = arith.extui %77 : i1 to i32
    %c0_i32_33 = arith.constant 0 : i32
    %79 = arith.cmpi ne, %78, %c0_i32_33 : i32
    scf.if %79 {
      %c0_34 = arith.constant 0 : index
      %c0_35 = arith.constant 0 : index
      %80 = vector.load %arg4[%c0_34, %c0_35] : memref<1x1xf32, #tpu.memory_space<vmem>>, vector<1x1xf32>
      %cst_36 = arith.constant 0.001953125 : f32
      %81 = vector.broadcast %cst_36 : f32 to vector<1x1xf32>
      %82 = arith.mulf %80, %81 : vector<1x1xf32>
      %c0_37 = arith.constant 0 : index
      %c0_38 = arith.constant 0 : index
      %83 = vector.load %arg5[%c0_37, %c0_38] : memref<1x1xf32, #tpu.memory_space<vmem>>, vector<1x1xf32>
      %cst_39 = arith.constant 1.000000e+00 : f32
      %84 = vector.broadcast %cst_39 : f32 to vector<1x1xf32>
      %85 = arith.mulf %84, %83 : vector<1x1xf32>
      %cst_40 = arith.constant 2.000000e+00 : f32
      %86 = vector.broadcast %cst_40 : f32 to vector<1x1xf32>
      %87 = arith.mulf %86, %82 : vector<1x1xf32>
      %88 = arith.addf %85, %87 : vector<1x1xf32>
      %c0_41 = arith.constant 0 : index
      %c0_42 = arith.constant 0 : index
      %89 = vector.load %arg3[%c0_41, %c0_42] : memref<1x1xf32, #tpu.memory_space<vmem>>, vector<1x1xf32>
      tpu.vector_store %arg3[%c0_41, %c0_42], %88 {strides = array<i32>} : memref<1x1xf32, #tpu.memory_space<vmem>>, vector<1x1xf32>,
    } else {
    }
    return
  }
  func.func @transform_0(%arg0: i32) -> (i32, i32, i32) {
    %c0_i32 = arith.constant 0 : i32
    %c0_i32_0 = arith.constant 0 : i32
    %c0_i32_1 = arith.constant 0 : i32
    %c0_i32_2 = arith.constant 0 : i32
    return %c0_i32, %c0_i32_0, %c0_i32_1 : i32, i32, i32
  }
  func.func @transform_1(%arg0: i32) -> (i32, i32) {
    %c0_i32 = arith.constant 0 : i32
    %c0_i32_0 = arith.constant 0 : i32
    %c0_i32_1 = arith.constant 0 : i32
    return %c0_i32, %c0_i32_0 : i32, i32
  }
  func.func @transform_2(%arg0: i32) -> (i32, i32) {
    %c0_i32 = arith.constant 0 : i32
    %c0_i32_0 = arith.constant 0 : i32
    %c0_i32_1 = arith.constant 0 : i32
    return %c0_i32, %c0_i32_0 : i32, i32
  }
}

</mosaic_0001>

<llo_original>
// kernel: tpu_custom_call.1
$region0: #{tpu_custom_call.1}
  #allocation0 [shape = 'u32[]', space=smem, size = 0x4, offset = 0x4, fixed_abs, tag = 'smem constant byte address 0x4 - core index']
  #allocation1 [shape = 'u32[144,128]{1,0:T(1,128)}', space=vmem, size = 0x12000, scoped, tag = 'internal scratch']
  #allocation2 [shape = 'f32[1,1]{1,0:T(1,128)}', space=vmem, size = 0x200, scoped, tag = 'scratch operand']
  #allocation3 [shape = 'f32[1,1]{1,0:T(1,128)}', space=vmem, size = 0x200, scoped, tag = 'scratch operand']
  %s0 = inlined_call_operand.hbm [shape: f32[2,8,128], index: 0, kind: input, shape index: {}]
  %s1 = inlined_call_operand.hbm [shape: f32[8,128], index: 1, kind: input, shape index: {}]
  %s2 = inlined_call_operand.hbm [shape: f32[1,1], index: 2, kind: output, shape index: {}]
  %s3 = sld [smem:[#allocation0]]
  $region57: #{tpu_custom_call.1} parent=0
    _
  %s5 = ssub.s32 1, %s3
  %s6 = scalar_select 0, %s5, %s3
  $region1: #{tpu_custom_call.1} parent=0
    #allocation4 [shape = 'u8[8192]{0}', space=vmem, size = 0x2000, scoped, tag = 'input window, operand 0, single buffered']
    #allocation5 [shape = 's32[2]{0}', space=sflag, size = 0x8, scoped, tag = 'scoped memory for tpu_custom_call.1']
    #allocation6 [shape = 's32[2]{0}', space=sflag, size = 0x8, scoped, tag = 'scoped memory for tpu_custom_call.1']
    #allocation7 [shape = 'u8[4096]{0}', space=vmem, size = 0x1000, scoped, tag = 'input window, operand 1, single buffered']
    #allocation8 [shape = 's32[1]{0}', space=sflag, size = 0x4, scoped, tag = 'scoped memory for tpu_custom_call.1']
    #allocation9 [shape = 'u8[512]{0}', space=vmem, size = 0x400, scoped, tag = 'output window, operand 0, single buffered']
    %7 = vsyncpa [#allocation5], 0
    %8 = vsyncpa [#allocation8], 0
    %9 = vsyncpa [#allocation6], 0
    loop: start=0, step=1, limit=10
    $region2: #{tpu_custom_call.1} parent=1 // loop_pre_header
      _
    $region3: #{tpu_custom_call.1} parent=1 // loop_header
      %s11 = sphi 0, %s15
      %p12 = scmp.ge.s32.totalorder %s11, 10
      %s19 = sphi 0, %s19
      %s21 = sphi 0, %s19
      %s22 = sphi 0, %s21
      %s36 = sphi 0, %s22
      %s40 = sphi 0, %s40
      %s42 = sphi 0, %s40
      %s43 = sphi 0, %s42
      %s57 = sphi 0, %s43
      %s61 = sphi 0, %s61
      %s63 = sphi 0, %s61
      %s64 = sphi 0, %s63
      %s78 = sphi 0, %s64
    $region4: #{tpu_custom_call.1} parent=1 // loop_header_branch
      %14 = sbr.rel (%p12) target = $region8
    $region5: #{tpu_custom_call.1} parent=1 // loop_body
      %s16 = ssub.s32 %s11, 1
      %s17 = ssub.s32 %s11, 2
      %s18 = sadd.s32 %s11, 1
      %s20 = sadd.s32 %s19, 1
      %p23 = scmp.eq.s32.totalorder %s11, 7
      %p24 = scmp.ne.s32.totalorder %s19, %s21
      %p25 = scmp.eq.s32.totalorder %s11, 0
      %p26 = por %p24, %p25
      %p27 = scmp.ne.s32.totalorder %s19, %s21
      %p28 = scmp.eq.s32.totalorder %s16, 7
      %p29 = por %p27, %p28
      %p30 = scmp.ne.s32.totalorder %s21, %s22
      %p31 = scmp.eq.s32.totalorder %s16, 0
      %p32 = por %p30, %p31
      %p33 = scmp.ne.s32.totalorder %s21, %s22
      %p34 = scmp.eq.s32.totalorder %s17, 7
      %p35 = por %p33, %p34
      %p37 = scmp.ne.s32.totalorder %s22, %s36
      %p38 = scmp.eq.s32.totalorder %s17, 0
      %p39 = por %p37, %p38
      %s41 = sadd.s32 %s40, 1
      %p44 = scmp.eq.s32.totalorder %s11, 7
      %p45 = scmp.ne.s32.totalorder %s40, %s42
      %p46 = scmp.eq.s32.totalorder %s11, 0
      %p47 = por %p45, %p46
      %p48 = scmp.ne.s32.totalorder %s40, %s42
      %p49 = scmp.eq.s32.totalorder %s16, 7
      %p50 = por %p48, %p49
      %p51 = scmp.ne.s32.totalorder %s42, %s43
      %p52 = scmp.eq.s32.totalorder %s16, 0
      %p53 = por %p51, %p52
      %p54 = scmp.ne.s32.totalorder %s42, %s43
      %p55 = scmp.eq.s32.totalorder %s17, 7
      %p56 = por %p54, %p55
      %p58 = scmp.ne.s32.totalorder %s43, %s57
      %p59 = scmp.eq.s32.totalorder %s17, 0
      %p60 = por %p58, %p59
      %s62 = sadd.s32 %s61, 1
      %p65 = scmp.eq.s32.totalorder %s11, 7
      %p66 = scmp.ne.s32.totalorder %s61, %s63
      %p67 = scmp.eq.s32.totalorder %s11, 0
      %p68 = por %p66, %p67
      %p69 = scmp.ne.s32.totalorder %s61, %s63
      %p70 = scmp.eq.s32.totalorder %s16, 7
      %p71 = por %p69, %p70
      %p72 = scmp.ne.s32.totalorder %s63, %s64
      %p73 = scmp.eq.s32.totalorder %s16, 0
      %p74 = por %p72, %p73
      %p75 = scmp.ne.s32.totalorder %s63, %s64
      %p76 = scmp.eq.s32.totalorder %s17, 7
      %p77 = por %p75, %p76
      %p79 = scmp.ne.s32.totalorder %s64, %s78
      %p80 = scmp.eq.s32.totalorder %s17, 0
      %p81 = por %p79, %p80
      %p82 = scmp.le.s32.totalorder 1, %s11
      %p83 = scmp.lt.s32.totalorder %s11, 9
      %p84 = pnand %p82, %p83
      %p85 = pneg %p84
      // Predicated region
      $region9: #{tpu_custom_call.1} parent=5 // pred_check
        _
      $region10: #{tpu_custom_call.1} parent=5 // pred_check_branch
        %87 = sbr.rel (%p84) target = $region12
      $region11: #{tpu_custom_call.1} parent=5 // pred_region
        %s88 = ssub.s32 %s11, 1
        // Predicated region
        $region13: #{tpu_custom_call.1} parent=11 // pred_check
          %p89 = pneg %p32
        $region14: #{tpu_custom_call.1} parent=11 // pred_check_branch
          %91 = sbr.rel (%p89) target = $region16
        $region15: #{tpu_custom_call.1} parent=11 // pred_region
          %s93 = ssub.s32 256, 256
          %94 = vsyncadd [#allocation5], %s93
          %s95 = sshll.u32 [#allocation4], 4
          %s96 = int_to_ptr.vmem [resolvable:$true] %s95
          %101 = dma.hbm_to_vmem [thread:$0]  %s0, 256, %s96, [#allocation5], 128, 128, 8
        $region16: #{tpu_custom_call.1} parent=11 // pred_fallthru
          _
        // Predicated region
        $region17: #{tpu_custom_call.1} parent=11 // pred_check
          %p102 = pneg %p53
        $region18: #{tpu_custom_call.1} parent=11 // pred_check_branch
          %104 = sbr.rel (%p102) target = $region20
        $region19: #{tpu_custom_call.1} parent=11 // pred_region
          %s106 = ssub.s32 128, 128
          %107 = vsyncadd [#allocation8], %s106
          %s109 = sshll.u32 [#allocation7], 4
          %s110 = int_to_ptr.vmem [resolvable:$true] %s109
          %112 = dma.hbm_to_vmem [thread:$0]  %s1, 128, %s110, [#allocation8]
        $region20: #{tpu_custom_call.1} parent=11 // pred_fallthru
          _
      $region12: #{tpu_custom_call.1} parent=5 // pred_fallthru
        _
      %p113 = scmp.lt.s32.totalorder %s11, 8
      // Predicated region
      $region21: #{tpu_custom_call.1} parent=5 // pred_check
        %p114 = pneg %p113
      $region22: #{tpu_custom_call.1} parent=5 // pred_check_branch
        %116 = sbr.rel (%p114) target = $region24
      $region23: #{tpu_custom_call.1} parent=5 // pred_region
        _
      $region24: #{tpu_custom_call.1} parent=5 // pred_fallthru
        _
      %p117 = scmp.le.s32.totalorder 1, %s11
      %p118 = scmp.lt.s32.totalorder %s11, 9
      %p119 = pnand %p117, %p118
      %p120 = pneg %p119
      // Predicated region
      $region25: #{tpu_custom_call.1} parent=5 // pred_check
        _
      $region26: #{tpu_custom_call.1} parent=5 // pred_check_branch
        %122 = sbr.rel (%p119) target = $region28
      $region27: #{tpu_custom_call.1} parent=5 // pred_region
        %s123 = ssub.s32 %s11, 1
        // Predicated region
        $region29: #{tpu_custom_call.1} parent=27 // pred_check
          %p124 = pneg %p32
        $region30: #{tpu_custom_call.1} parent=27 // pred_check_branch
          %126 = sbr.rel (%p124) target = $region32
        $region31: #{tpu_custom_call.1} parent=27 // pred_region
          %127 = dma.done [#allocation5], 256
        $region32: #{tpu_custom_call.1} parent=27 // pred_fallthru
          _
        // Predicated region
        $region33: #{tpu_custom_call.1} parent=27 // pred_check
          %p128 = pneg %p53
        $region34: #{tpu_custom_call.1} parent=27 // pred_check_branch
          %130 = sbr.rel (%p128) target = $region36
        $region35: #{tpu_custom_call.1} parent=27 // pred_region
          %131 = dma.done [#allocation8], 128
        $region36: #{tpu_custom_call.1} parent=27 // pred_fallthru
          _
        %p132 = pneg %p32
        %p133 = pneg %p29
        %p134 = pneg %p53
        %p135 = pneg %p50
        %p136 = pneg %p74
        %p137 = pneg %p71
        %v139 = vld [vmem:[#allocation7] sm:$0xff]
        %p140 = scmp.eq.s32.totalorder %s16, 0
        // Predicated region
        $region37: #{tpu_custom_call.1} parent=27 // pred_check
          %p141 = pneg %p140
        $region38: #{tpu_custom_call.1} parent=27 // pred_check_branch
          %143 = sbr.rel (%p141) target = $region40
        $region39: #{tpu_custom_call.1} parent=27 // pred_region
          %vm144 = vcmask 0
          %145 = vst.msk [vmem:[#allocation2] sm:$0x1] %vm144, 0.0
          %v146 = vlaneseq
          %v147 = vshrl.u32 %v146, 7
          %v148 = vlaneseq
          %v149 = vand.u32 %v148, 127
          %vm150 = vcmp.ne.s32.totalorder %v147, %v149
          %v151 = vld [vmem:[#allocation4] sm:$0xff]
          %v152 = vmul.f32 %v151, %v151
          %153 = vadd.xlane.f32.xlu0 %v152
          %v154 = vpop.xlane.xlu0 %153
          %v155 = vadd.f32 %v154, 1e-08
          %v156 = vrsqrt.pop %v155
          %v157 = vmul.f32 %v151, %v156
          %v158 = vpack.c.bf16 %v157, %v157
          %159 = vmatprep.subr.bf16.mxu0 0
          %160 = vmatpush1.bf16.xpose.msra.mxu0 0
          %161 = vmatprep.subr.bf16.mxu0 0
          %162 = vmatpush1.bf16.xpose.msra.mxu0 0
          %163 = vmatprep.subr.bf16.mxu0 0
          %164 = vmatpush1.bf16.xpose.msra.mxu0 0
          %165 = vmatprep.subr.bf16.mxu0 0
          %166 = vmatpush1.bf16.xpose.msra.mxu0 0
          %167 = vmatprep.subr.bf16.mxu0 0
          %168 = vmatpush1.bf16.xpose.msra.mxu0 0
          %169 = vmatprep.subr.bf16.mxu0 0
          %170 = vmatpush1.bf16.xpose.msra.mxu0 0
          %171 = vmatprep.subr.bf16.mxu0 0
          %172 = vmatpush1.bf16.xpose.msra.mxu0 0
          %173 = vmatprep.subr.bf16.mxu0 0
          %174 = vmatpush1.bf16.xpose.msra.mxu0 %v158
          %175 = vmatprep.subr.bf16.mxu0 0
          %176 = vmatpush2.bf16.xpose.msra.mxu0 0
          %177 = vmatprep.subr.bf16.mxu0 0
          %178 = vmatpush2.bf16.xpose.msra.mxu0 0
          %179 = vmatprep.subr.bf16.mxu0 0
          %180 = vmatpush2.bf16.xpose.msra.mxu0 0
          %181 = vmatprep.subr.bf16.mxu0 0
          %182 = vmatpush2.bf16.xpose.msra.mxu0 0
          %183 = vmatprep.subr.bf16.mxu0 0
          %184 = vmatpush2.bf16.xpose.msra.mxu0 0
          %185 = vmatprep.subr.bf16.mxu0 0
          %186 = vmatpush2.bf16.xpose.msra.mxu0 0
          %187 = vmatprep.subr.bf16.mxu0 0
          %188 = vmatpush2.bf16.xpose.msra.mxu0 0
          %189 = vmatprep.subr.bf16.mxu0 0
          %190 = vmatpush2.bf16.xpose.msra.mxu0 0
          %191 = vmatprep.mubr.bf16.mxu0 0
          %192 = vmatmul.mubr.bf16.gmra.mxu0 %v158
          %v193 = vpop.f32.mrf.mxu0
          %v194 = vadd.f32 0.0, %v193
          %v195 = vpop.f32.mrf.mxu0
          %v196 = vpop.f32.mrf.mxu0
          %v197 = vpop.f32.mrf.mxu0
          %198 = vdwg.mxu0
          %v199 = vmul.f32 %v194, 2.0
          %v200 = vsub.f32 2.0, %v199
          %v201 = vmax.f32 %v200, 0.0
          %v202 = vrsqrt.pop %v201
          %v203 = vmul.f32 %v201, %v202
          %vm204 = vcmp.eq.f32.partialorder %v201, inf
          %v205 = vsel %vm204, %v201, %v203
          %vm206 = vcmp.eq.f32.partialorder %v201, 0.0
          %v207 = vand.u32 %v201, 2147483648
          %v208 = vsel %vm206, %v207, %v205
          %v209 = vsel %vm150, %v208, 0.0
          %s210 = scalar_lea.vmem [#allocation4], 8
          %v211 = vld [vmem:[%s210] sm:$0xff]
          %v212 = vmul.f32 %v211, %v211
          %213 = vadd.xlane.f32.xlu0 %v212
          %v214 = vpop.xlane.xlu0 %213
          %v215 = vadd.f32 %v214, 1e-08
          %v216 = vrsqrt.pop %v215
          %v217 = vmul.f32 %v211, %v216
          %v218 = vpack.c.bf16 %v217, %v217
          %219 = vmatprep.subr.bf16.mxu0 0
          %220 = vmatpush1.bf16.xpose.msra.mxu0 0
          %221 = vmatprep.subr.bf16.mxu0 0
          %222 = vmatpush1.bf16.xpose.msra.mxu0 0
          %223 = vmatprep.subr.bf16.mxu0 0
          %224 = vmatpush1.bf16.xpose.msra.mxu0 0
          %225 = vmatprep.subr.bf16.mxu0 0
          %226 = vmatpush1.bf16.xpose.msra.mxu0 0
          %227 = vmatprep.subr.bf16.mxu0 0
          %228 = vmatpush1.bf16.xpose.msra.mxu0 0
          %229 = vmatprep.subr.bf16.mxu0 0
          %230 = vmatpush1.bf16.xpose.msra.mxu0 0
          %231 = vmatprep.subr.bf16.mxu0 0
          %232 = vmatpush1.bf16.xpose.msra.mxu0 0
          %233 = vmatprep.subr.bf16.mxu0 0
          %234 = vmatpush1.bf16.xpose.msra.mxu0 %v218
          %235 = vmatprep.subr.bf16.mxu0 0
          %236 = vmatpush2.bf16.xpose.msra.mxu0 0
          %237 = vmatprep.subr.bf16.mxu0 0
          %238 = vmatpush2.bf16.xpose.msra.mxu0 0
          %239 = vmatprep.subr.bf16.mxu0 0
          %240 = vmatpush2.bf16.xpose.msra.mxu0 0
          %241 = vmatprep.subr.bf16.mxu0 0
          %242 = vmatpush2.bf16.xpose.msra.mxu0 0
          %243 = vmatprep.subr.bf16.mxu0 0
          %244 = vmatpush2.bf16.xpose.msra.mxu0 0
          %245 = vmatprep.subr.bf16.mxu0 0
          %246 = vmatpush2.bf16.xpose.msra.mxu0 0
          %247 = vmatprep.subr.bf16.mxu0 0
          %248 = vmatpush2.bf16.xpose.msra.mxu0 0
          %249 = vmatprep.subr.bf16.mxu0 0
          %250 = vmatpush2.bf16.xpose.msra.mxu0 0
          %251 = vmatprep.mubr.bf16.mxu0 0
          %252 = vmatmul.mubr.bf16.gmra.mxu0 %v218
          %v253 = vpop.f32.mrf.mxu0
          %v254 = vadd.f32 0.0, %v253
          %v255 = vpop.f32.mrf.mxu0
          %v256 = vpop.f32.mrf.mxu0
          %v257 = vpop.f32.mrf.mxu0
          %258 = vdwg.mxu0
          %v259 = vmul.f32 %v254, 2.0
          %v260 = vsub.f32 2.0, %v259
          %v261 = vmax.f32 %v260, 0.0
          %v262 = vrsqrt.pop %v261
          %v263 = vmul.f32 %v261, %v262
          %vm264 = vcmp.eq.f32.partialorder %v261, inf
          %v265 = vsel %vm264, %v261, %v263
          %vm266 = vcmp.eq.f32.partialorder %v261, 0.0
          %v267 = vand.u32 %v261, 2147483648
          %v268 = vsel %vm266, %v267, %v265
          %v269 = vsel %vm150, %v268, 0.0
          %v270 = vadd.f32 %v209, %v269
          %v271 = vmul.f32 %v270, 0.5
          %v272 = vmul.f32 %v139, %v139
          %273 = vadd.xlane.f32.xlu0 %v272
          %v274 = vpop.xlane.xlu0 %273
          %v275 = vadd.f32 %v274, 1e-08
          %v276 = vrsqrt.pop %v275
          %v277 = vmul.f32 %v139, %v276
          %v278 = vpack.c.bf16 %v277, %v277
          %279 = vmatprep.subr.bf16.mxu0 0
          %280 = vmatpush1.bf16.xpose.msra.mxu0 0
          %281 = vmatprep.subr.bf16.mxu0 0
          %282 = vmatpush1.bf16.xpose.msra.mxu0 0
          %283 = vmatprep.subr.bf16.mxu0 0
          %284 = vmatpush1.bf16.xpose.msra.mxu0 0
          %285 = vmatprep.subr.bf16.mxu0 0
          %286 = vmatpush1.bf16.xpose.msra.mxu0 0
          %287 = vmatprep.subr.bf16.mxu0 0
          %288 = vmatpush1.bf16.xpose.msra.mxu0 0
          %289 = vmatprep.subr.bf16.mxu0 0
          %290 = vmatpush1.bf16.xpose.msra.mxu0 0
          %291 = vmatprep.subr.bf16.mxu0 0
          %292 = vmatpush1.bf16.xpose.msra.mxu0 0
          %293 = vmatprep.subr.bf16.mxu0 0
          %294 = vmatpush1.bf16.xpose.msra.mxu0 %v278
          %295 = vmatprep.subr.bf16.mxu0 0
          %296 = vmatpush2.bf16.xpose.msra.mxu0 0
          %297 = vmatprep.subr.bf16.mxu0 0
          %298 = vmatpush2.bf16.xpose.msra.mxu0 0
          %299 = vmatprep.subr.bf16.mxu0 0
          %300 = vmatpush2.bf16.xpose.msra.mxu0 0
          %301 = vmatprep.subr.bf16.mxu0 0
          %302 = vmatpush2.bf16.xpose.msra.mxu0 0
          %303 = vmatprep.subr.bf16.mxu0 0
          %304 = vmatpush2.bf16.xpose.msra.mxu0 0
          %305 = vmatprep.subr.bf16.mxu0 0
          %306 = vmatpush2.bf16.xpose.msra.mxu0 0
          %307 = vmatprep.subr.bf16.mxu0 0
          %308 = vmatpush2.bf16.xpose.msra.mxu0 0
          %309 = vmatprep.subr.bf16.mxu0 0
          %310 = vmatpush2.bf16.xpose.msra.mxu0 0
          %311 = vmatprep.mubr.bf16.mxu0 0
          %312 = vmatmul.mubr.bf16.gmra.mxu0 %v278
          %v313 = vpop.f32.mrf.mxu0
          %v314 = vadd.f32 0.0, %v313
          %v315 = vpop.f32.mrf.mxu0
          %v316 = vpop.f32.mrf.mxu0
          %v317 = vpop.f32.mrf.mxu0
          %318 = vdwg.mxu0
          %v319 = vmul.f32 %v314, 2.0
          %v320 = vsub.f32 2.0, %v319
          %v321 = vmax.f32 %v320, 0.0
          %v322 = vrsqrt.pop %v321
          %v323 = vmul.f32 %v321, %v322
          %vm324 = vcmp.eq.f32.partialorder %v321, inf
          %v325 = vsel %vm324, %v321, %v323
          %vm326 = vcmp.eq.f32.partialorder %v321, 0.0
          %v327 = vand.u32 %v321, 2147483648
          %v328 = vsel %vm326, %v327, %v325
          %v329 = vsel %vm150, %v328, 0.0
          %vm330 = vcmask 64512
          %v331 = vsel %vm330, %v271, 0.0
          %332 = vadd.xlane.f32.xlu0 %v331
          %v333 = vpop.xlane.xlu0 %332
          %v334 = vmul.f32 %v333, 0.14285715
          %v335 = vsel %vm330, %v329, 0.0
          %336 = vadd.xlane.f32.xlu0 %v335
          %v337 = vpop.xlane.xlu0 %336
          %v338 = vmul.f32 %v337, 0.14285715
          %v339 = vadd.f32 %v338, 1e-08
          %v340 = vrcp.pop %v339
          %v341 = vmul.f32 %v329, %v340
          %v342 = vadd.f32 %v334, 1e-08
          %v343 = vrcp.pop %v342
          %v344 = vmul.f32 %v271, %v343
          %v345 = vsub.f32 %v341, %v344
          %v346 = vand.u32 2147483647, %v345
          %vm347 = vcmp.lt.f32.partialorder %v346, 1.0
          %v348 = vmul.f32 %v345, 0.5
          %v349 = vmul.f32 %v348, %v345
          %v350 = vsub.f32 %v346, 0.5
          %v351 = vsel %vm347, %v349, %v350
          %v352 = vsel %vm330, %v351, 0.0
          %353 = vadd.xlane.f32.xlu0 %v352
          %v354 = vpop.xlane.xlu0 %353
          %v355 = vrot.slane %v354, 4
          %v356 = vadd.f32 %v354, %v355
          %v357 = vrot.slane %v356, 2
          %v358 = vadd.f32 %v356, %v357
          %v359 = vrot.slane %v358, 1
          %v360 = vadd.f32 %v358, %v359
          %s361 = vtos %v360
          %s362 = smul.f32 %s361, 0.015625
          %v363 = vstv %s362
          %364 = vst.msk [vmem:[#allocation3] sm:$0x1] %vm144, %v363
        $region40: #{tpu_custom_call.1} parent=27 // pred_fallthru
          _
        %s365 = scalar_lea.vmem [#allocation7], %s16
        %v366 = vld [vmem:[%s365] sm:$0x1]
        %v367 = vlaneseq
        %v368 = vshrl.u32 %v367, 7
        %v369 = vsub.s32 0, %v368
        %v370 = vrot.slane %v366, %v369
        %v371 = vsub.f32 %v139, %v370
        %v372 = vmul.f32 %v371, %v371
        %373 = vadd.xlane.f32.xlu0 %v372
        %v374 = vpop.xlane.xlu0 %373
        %v375 = vadd.f32 %v374, 1e-08
        %v376 = vrsqrt.pop %v375
        %v377 = vmul.f32 %v371, %v376
        %v378 = vpack.c.bf16 %v377, %v377
        %379 = vmatprep.subr.bf16.mxu0 0
        %380 = vmatpush1.bf16.xpose.msra.mxu0 0
        %381 = vmatprep.subr.bf16.mxu0 0
        %382 = vmatpush1.bf16.xpose.msra.mxu0 0
        %383 = vmatprep.subr.bf16.mxu0 0
        %384 = vmatpush1.bf16.xpose.msra.mxu0 0
        %385 = vmatprep.subr.bf16.mxu0 0
        %386 = vmatpush1.bf16.xpose.msra.mxu0 0
        %387 = vmatprep.subr.bf16.mxu0 0
        %388 = vmatpush1.bf16.xpose.msra.mxu0 0
        %389 = vmatprep.subr.bf16.mxu0 0
        %390 = vmatpush1.bf16.xpose.msra.mxu0 0
        %391 = vmatprep.subr.bf16.mxu0 0
        %392 = vmatpush1.bf16.xpose.msra.mxu0 0
        %393 = vmatprep.subr.bf16.mxu0 0
        %394 = vmatpush1.bf16.xpose.msra.mxu0 %v378
        %395 = vmatprep.subr.bf16.mxu0 0
        %396 = vmatpush2.bf16.xpose.msra.mxu0 0
        %397 = vmatprep.subr.bf16.mxu0 0
        %398 = vmatpush2.bf16.xpose.msra.mxu0 0
        %399 = vmatprep.subr.bf16.mxu0 0
        %400 = vmatpush2.bf16.xpose.msra.mxu0 0
        %401 = vmatprep.subr.bf16.mxu0 0
        %402 = vmatpush2.bf16.xpose.msra.mxu0 0
        %403 = vmatprep.subr.bf16.mxu0 0
        %404 = vmatpush2.bf16.xpose.msra.mxu0 0
        %405 = vmatprep.subr.bf16.mxu0 0
        %406 = vmatpush2.bf16.xpose.msra.mxu0 0
        %407 = vmatprep.subr.bf16.mxu0 0
        %408 = vmatpush2.bf16.xpose.msra.mxu0 0
        %409 = vmatprep.subr.bf16.mxu0 0
        %410 = vmatpush2.bf16.xpose.msra.mxu0 0
        %411 = vmatprep.mubr.bf16.mxu0 0
        %412 = vmatmul.mubr.bf16.gmra.mxu0 %v378
        %v413 = vpop.f32.mrf.mxu0
        %v414 = vadd.f32 0.0, %v413
        %v415 = vpop.f32.mrf.mxu0
        %v416 = vpop.f32.mrf.mxu0
        %v417 = vpop.f32.mrf.mxu0
        %418 = vdwg.mxu0
        %v419 = vld [vmem:[#allocation4] sm:$0xff]
        %s420 = scalar_lea.vmem [#allocation4], %s16
        %v421 = vld [vmem:[%s420] sm:$0x1]
        %v422 = vlaneseq
        %v423 = vshrl.u32 %v422, 7
        %v424 = vsub.s32 0, %v423
        %v425 = vrot.slane %v421, %v424
        %v426 = vsub.f32 %v419, %v425
        %v427 = vmul.f32 %v426, %v426
        %428 = vadd.xlane.f32.xlu0 %v427
        %v429 = vpop.xlane.xlu0 %428
        %v430 = vadd.f32 %v429, 1e-08
        %v431 = vrsqrt.pop %v430
        %v432 = vmul.f32 %v426, %v431
        %v433 = vpack.c.bf16 %v432, %v432
        %s434 = scalar_lea.vmem [#allocation4], 8
        %v435 = vld [vmem:[%s434] sm:$0xff]
        %s436 = scalar_lea.vmem %s434, %s16 [#allocation4]
        %v437 = vld [vmem:[%s436] sm:$0x1]
        %v438 = vlaneseq
        %v439 = vshrl.u32 %v438, 7
        %v440 = vsub.s32 0, %v439
        %v441 = vrot.slane %v437, %v440
        %v442 = vsub.f32 %v435, %v441
        %v443 = vmul.f32 %v442, %v442
        %444 = vadd.xlane.f32.xlu0 %v443
        %v445 = vpop.xlane.xlu0 %444
        %v446 = vadd.f32 %v445, 1e-08
        %v447 = vrsqrt.pop %v446
        %v448 = vmul.f32 %v442, %v447
        %v449 = vpack.c.bf16 %v448, %v448
        %450 = vmatprep.subr.bf16.mxu0 0
        %451 = vmatpush1.bf16.xpose.msra.mxu0 0
        %452 = vmatprep.subr.bf16.mxu0 0
        %453 = vmatpush1.bf16.xpose.msra.mxu0 0
        %454 = vmatprep.subr.bf16.mxu0 0
        %455 = vmatpush1.bf16.xpose.msra.mxu0 0
        %456 = vmatprep.subr.bf16.mxu0 0
        %457 = vmatpush1.bf16.xpose.msra.mxu0 0
        %458 = vmatprep.subr.bf16.mxu0 0
        %459 = vmatpush1.bf16.xpose.msra.mxu0 0
        %460 = vmatprep.subr.bf16.mxu0 0
        %461 = vmatpush1.bf16.xpose.msra.mxu0 0
        %462 = vmatprep.subr.bf16.mxu0 0
        %463 = vmatpush1.bf16.xpose.msra.mxu0 0
        %464 = vmatprep.subr.bf16.mxu0 0
        %465 = vmatpush1.bf16.xpose.msra.mxu0 %v449
        %466 = vmatprep.subr.bf16.mxu0 0
        %467 = vmatpush2.bf16.xpose.msra.mxu0 0
        %468 = vmatprep.subr.bf16.mxu0 0
        %469 = vmatpush2.bf16.xpose.msra.mxu0 0
        %470 = vmatprep.subr.bf16.mxu0 0
        %471 = vmatpush2.bf16.xpose.msra.mxu0 0
        %472 = vmatprep.subr.bf16.mxu0 0
        %473 = vmatpush2.bf16.xpose.msra.mxu0 0
        %474 = vmatprep.subr.bf16.mxu0 0
        %475 = vmatpush2.bf16.xpose.msra.mxu0 0
        %476 = vmatprep.subr.bf16.mxu0 0
        %477 = vmatpush2.bf16.xpose.msra.mxu0 0
        %478 = vmatprep.subr.bf16.mxu0 0
        %479 = vmatpush2.bf16.xpose.msra.mxu0 0
        %480 = vmatprep.subr.bf16.mxu0 0
        %481 = vmatpush2.bf16.xpose.msra.mxu0 0
        %482 = vmatprep.mubr.bf16.mxu0 0
        %483 = vmatmul.mubr.bf16.gmra.mxu0 %v449
        %v484 = vpop.f32.mrf.mxu0
        %v485 = vadd.f32 0.0, %v484
        %v486 = vpop.f32.mrf.mxu0
        %v487 = vpop.f32.mrf.mxu0
        %v488 = vpop.f32.mrf.mxu0
        %489 = vdwg.mxu0
        %490 = vmatprep.subr.bf16.mxu0 0
        %491 = vmatpush1.bf16.xpose.msra.mxu0 0
        %492 = vmatprep.subr.bf16.mxu0 0
        %493 = vmatpush1.bf16.xpose.msra.mxu0 0
        %494 = vmatprep.subr.bf16.mxu0 0
        %495 = vmatpush1.bf16.xpose.msra.mxu0 0
        %496 = vmatprep.subr.bf16.mxu0 0
        %497 = vmatpush1.bf16.xpose.msra.mxu0 0
        %498 = vmatprep.subr.bf16.mxu0 0
        %499 = vmatpush1.bf16.xpose.msra.mxu0 0
        %500 = vmatprep.subr.bf16.mxu0 0
        %501 = vmatpush1.bf16.xpose.msra.mxu0 0
        %502 = vmatprep.subr.bf16.mxu0 0
        %503 = vmatpush1.bf16.xpose.msra.mxu0 0
        %504 = vmatprep.subr.bf16.mxu0 0
        %505 = vmatpush1.bf16.xpose.msra.mxu0 %v433
        %506 = vmatprep.subr.bf16.mxu0 0
        %507 = vmatpush2.bf16.xpose.msra.mxu0 0
        %508 = vmatprep.subr.bf16.mxu0 0
        %509 = vmatpush2.bf16.xpose.msra.mxu0 0
        %510 = vmatprep.subr.bf16.mxu0 0
        %511 = vmatpush2.bf16.xpose.msra.mxu0 0
        %512 = vmatprep.subr.bf16.mxu0 0
        %513 = vmatpush2.bf16.xpose.msra.mxu0 0
        %514 = vmatprep.subr.bf16.mxu0 0
        %515 = vmatpush2.bf16.xpose.msra.mxu0 0
        %516 = vmatprep.subr.bf16.mxu0 0
        %517 = vmatpush2.bf16.xpose.msra.mxu0 0
        %518 = vmatprep.subr.bf16.mxu0 0
        %519 = vmatpush2.bf16.xpose.msra.mxu0 0
        %520 = vmatprep.subr.bf16.mxu0 0
        %521 = vmatpush2.bf16.xpose.msra.mxu0 0
        %522 = vmatprep.mubr.bf16.mxu0 0
        %523 = vmatmul.mubr.bf16.gmra.mxu0 %v433
        %v524 = vpop.f32.mrf.mxu0
        %v525 = vadd.f32 %v485, %v524
        %v526 = vpop.f32.mrf.mxu0
        %v527 = vpop.f32.mrf.mxu0
        %v528 = vpop.f32.mrf.mxu0
        %529 = vdwg.mxu0
        %v530 = vmul.f32 %v525, 0.5
        %v531 = vsub.f32 %v414, %v530
        %v532 = vand.u32 2147483647, %v531
        %vm533 = vcmp.lt.f32.partialorder %v532, 1.0
        %v534 = vmul.f32 %v531, 0.5
        %v535 = vmul.f32 %v534, %v531
        %v536 = vsub.f32 %v532, 0.5
        %v537 = vsel %vm533, %v535, %v536
        %v538 = vld [vmem:[#allocation2] sm:$0x1]
        %vm539 = vcmask 64512
        %v540 = vsel %vm539, %v537, 0.0
        %541 = vadd.xlane.f32.xlu0 %v540
        %v542 = vpop.xlane.xlu0 %541
        %v543 = vrot.slane %v542, 4
        %v544 = vadd.f32 %v542, %v543
        %v545 = vrot.slane %v544, 2
        %v546 = vadd.f32 %v544, %v545
        %v547 = vrot.slane %v546, 1
        %v548 = vadd.f32 %v546, %v547
        %s549 = vtos %v548
        %v550 = vstv %s549
        %v551 = vadd.f32 %v538, %v550
        %vm552 = vcmask 0
        %553 = vst.msk [vmem:[#allocation2] sm:$0x1] %vm552, %v551
        %p554 = scmp.eq.s32.totalorder %s16, 7
        // Predicated region
        $region41: #{tpu_custom_call.1} parent=27 // pred_check
          %p555 = pneg %p554
        $region42: #{tpu_custom_call.1} parent=27 // pred_check_branch
          %557 = sbr.rel (%p555) target = $region44
        $region43: #{tpu_custom_call.1} parent=27 // pred_region
          %v558 = vld [vmem:[#allocation2] sm:$0x1]
          %v559 = vmul.f32 %v558, 0.001953125
          %v560 = vld [vmem:[#allocation3] sm:$0x1]
          %v561 = vmul.f32 %v559, 2.0
          %v562 = vadd.f32 %v560, %v561
          %563 = vst.msk [vmem:[#allocation9] sm:$0x1] %vm552, %v562
        $region44: #{tpu_custom_call.1} parent=27 // pred_fallthru
          _
        // Predicated region
        $region45: #{tpu_custom_call.1} parent=27 // pred_check
          %p564 = pneg %p71
        $region46: #{tpu_custom_call.1} parent=27 // pred_check_branch
          %566 = sbr.rel (%p564) target = $region48
        $region47: #{tpu_custom_call.1} parent=27 // pred_region
          %s568 = ssub.s32 16, 16
          %569 = vsyncadd [#allocation6], %s568
          %s571 = sshll.u32 [#allocation9], 4
          %s572 = int_to_ptr.vmem [resolvable:$true] %s571
          %574 = dma.vmem_to_hbm [thread:$0]  %s572, 16, %s2, [#allocation6]
        $region48: #{tpu_custom_call.1} parent=27 // pred_fallthru
          _
        // Predicated region
        $region49: #{tpu_custom_call.1} parent=27 // pred_check
          %p575 = pneg %p71
        $region50: #{tpu_custom_call.1} parent=27 // pred_check_branch
          %577 = sbr.rel (%p575) target = $region52
        $region51: #{tpu_custom_call.1} parent=27 // pred_region
          %578 = dma.done [#allocation6], 16
        $region52: #{tpu_custom_call.1} parent=27 // pred_fallthru
          _
      $region28: #{tpu_custom_call.1} parent=5 // pred_fallthru
        _
      %p579 = scmp.le.s32.totalorder 2, %s11
      // Predicated region
      $region53: #{tpu_custom_call.1} parent=5 // pred_check
        %p580 = pneg %p579
      $region54: #{tpu_custom_call.1} parent=5 // pred_check_branch
        %582 = sbr.rel (%p580) target = $region56
      $region55: #{tpu_custom_call.1} parent=5 // pred_region
        %s583 = ssub.s32 %s11, 2
      $region56: #{tpu_custom_call.1} parent=5 // pred_fallthru
        _
    $region6: #{tpu_custom_call.1} parent=1 // loop_footer
      %s15 = sadd.s32 1, %s11
    $region7: #{tpu_custom_call.1} parent=1 // loop_footer_branch
      %10 = sbr.rel target = $region3
    $region8: #{tpu_custom_call.1} parent=1 // loop_exit
      _
    %584 = vsyncpa [#allocation5], 1
    %s585 = scalar_lea.sflag [#allocation5], 1
    %586 = vsyncpa %s585, 1
    %587 = vsyncpa [#allocation8], 1
    %588 = vsyncpa [#allocation6], 1
    %s589 = scalar_lea.sflag [#allocation6], 1
    %590 = vsyncpa %s589, 1

</llo_original>
